<compile_context>
chip_gen: v7x
topology: tpu7x:2x2x1
jax: 0.10.0
libtpu: 0.0.40
codegen_flags: <defaults>
</compile_context>

<pallas_src>
import functools

import jax
import jax.numpy as jnp
from jax.experimental import pallas as pl
from jax.experimental.pallas import tpu as pltpu


# ----------------------------------------------------------------------------
# Fused Pallas kernel: cached in-kernel weight hash-quantization + two GEMMs.
#   w_ref        : (O, K)      f32, VMEM   (K = Cin*KH*KW), grid-invariant
#   hv_ref       : (buckets,)  f32, SMEM
#   px_ref       : (K, BM)     f32, VMEM   im2col patches of x       (M-tile)
#   pxh_ref      : (K, BM)     f32, VMEM   im2col patches of x_hash  (M-tile)
#   outs_ref     : (2*O, BM)   [conv(x, W) ; conv(x, HW)]   (stacked output)
#   out_hash_ref : (O, BM)     conv(x_hash, HW)
#   lhs_ref      : (2*O, K)    VMEM scratch caching [W ; HW] across grid steps
# ----------------------------------------------------------------------------
def _fused_hashed_conv_kernel(w_ref, hv_ref, px_ref, pxh_ref,
                              outs_ref, out_hash_ref, lhs_ref,
                              *, buckets, o_dim):
    # Quantize once per outer chunk.  Inner grid axis is "arbitrary" (sequential
    # per core), so program_id(1) == 0 fires at the start of every core's chunk
    # even when the outer ("parallel") axis is sharded across TensorCores.
    @pl.when(pl.program_id(1) == 0)
    def _():
        w = w_ref[...]                                   # (O, K) f32
        w_max = jnp.max(w)
        w_min = jnp.min(w)
        step = (w_max - w_min) / buckets
        hw = w
        for i in range(buckets):                         # buckets tiny; static unroll
            th_low = i * step + w_min
            th_high = (i + 1) * step + w_min
            hw = jnp.where((w >= th_low) & (w < th_high), hv_ref[i], hw)
        # elements equal to the max always map to the last hash value
        hw = jnp.where(w == w_max, hv_ref[buckets - 1], hw)
        lhs_ref[:o_dim, :] = w
        lhs_ref[o_dim:, :] = hw

    lhs = lhs_ref[...]                                   # (2O, K) = [W ; HW]
    px = px_ref[...]                                     # (K, BM)

    # One stacked matmul: rows [:O] -> out, rows [O:] -> hash_out.
    outs_ref[...] = jnp.dot(
        lhs, px, preferred_element_type=jnp.float32).astype(outs_ref.dtype)
    out_hash_ref[...] = jnp.dot(
        lhs[o_dim:, :], pxh_ref[...],
        preferred_element_type=jnp.float32).astype(out_hash_ref.dtype)


# ----------------------------------------------------------------------------
# Wrapper glue: im2col (layout only, done once per input) + pallas_call.
# ----------------------------------------------------------------------------
def _im2col(x_nchw, KH, KW, padding):
    """(N, C, H, W) -> (C*KH*KW, N*OH*OW) with K ordered (c, kh, kw) to match
    conv_weight.reshape(O, C*KH*KW).  The (cheap, unexpanded) input is transposed
    first so the 9x-expanded tensor needs no post-hoc transpose pass."""
    N, C, H, W = x_nchw.shape
    OH = H + 2 * padding - KH + 1
    OW = W + 2 * padding - KW + 1
    xt = jnp.transpose(x_nchw, (1, 0, 2, 3))             # (C, N, H, W) — pre-expansion
    xp = jnp.pad(xt, ((0, 0), (0, 0), (padding, padding), (padding, padding)))
    taps = [xp[:, :, kh:kh + OH, kw:kw + OW]
            for kh in range(KH) for kw in range(KW)]      # each (C, N, OH, OW)
    p = jnp.stack(taps, axis=1)                           # (C, KH*KW, N, OH, OW)
    return p.reshape(C * KH * KW, N * OH * OW)            # (K, N*OH*OW)


def hashed_conv2d_forward(x, x_hash, conv_weight, hash_value, buckets, padding,
                          block_m=8192):
    N, C, H, W = x.shape
    O, C2, KH, KW = conv_weight.shape
    assert C == C2
    OH = H + 2 * padding - KH + 1
    OW = W + 2 * padding - KW + 1
    K = C * KH * KW
    NM = N * OH * OW

    px = _im2col(x, KH, KW, padding)                      # (K, NM)
    pxh = _im2col(x_hash, KH, KW, padding)                # (K, NM)
    w2d = conv_weight.reshape(O, K)                       # (O, K) lane-dense weight
    hv = hash_value.reshape(buckets)

    # M-tile: multiple of 128 (unmasked lane-dense vst), large enough to amortize
    # the ~0.35us per-grid-step overhead; ~768 B of VMEM per column.
    bm = max(128, min(block_m, NM))
    bm = ((bm + 127) // 128) * 128
    n_tiles = pl.cdiv(NM, bm)
    # 2-D grid: outer "parallel" chunks (shardable across v7x's 2 TensorCores),
    # inner "arbitrary" steps.  Hash-weight re-derived once per outer chunk.
    if n_tiles >= 2 and n_tiles % 2 == 0:
        n_outer, n_inner = 2, n_tiles // 2
    else:
        n_outer, n_inner = 1, n_tiles

    m_map = lambda o, i: (0, o * n_inner + i)

    stacked2d, out_hash2d = pl.pallas_call(
        functools.partial(_fused_hashed_conv_kernel, buckets=buckets, o_dim=O),
        out_shape=(
            jax.ShapeDtypeStruct((2 * O, NM), jnp.float32),   # [out ; hash_out]
            jax.ShapeDtypeStruct((O, NM), jnp.float32),       # out_hash
        ),
        grid=(n_outer, n_inner),
        in_specs=[
            pl.BlockSpec((O, K), lambda o, i: (0, 0)),               # weight (resident)
            pl.BlockSpec(memory_space=pltpu.MemorySpace.SMEM),       # hash_value
            pl.BlockSpec((K, bm), m_map),                            # x patches
            pl.BlockSpec((K, bm), m_map),                            # x_hash patches
        ],
        out_specs=(
            pl.BlockSpec((2 * O, bm), m_map),
            pl.BlockSpec((O, bm), m_map),
        ),
        scratch_shapes=[pltpu.VMEM((2 * O, K), jnp.float32)],        # cached [W ; HW]
        compiler_params=pltpu.CompilerParams(
            dimension_semantics=("parallel", "arbitrary"),
            vmem_limit_bytes=48 * 1024 * 1024,
        ),
    )(w2d, hv, px, pxh)

    out2d = stacked2d[:O]
    hash_out2d = stacked2d[O:]

    def to_nchw(y2d):
        # (O, N*OH*OW) -> (N, O, OH, OW)  (tiny transpose, layout glue only)
        return jnp.transpose(y2d.reshape(O, N, OH, OW), (1, 0, 2, 3))

    return to_nchw(out2d), to_nchw(hash_out2d), to_nchw(out_hash2d)


# ----------------------------------------------------------------------------
# Pure-JAX reference (for a sanity check)
# ----------------------------------------------------------------------------
def _ref_hash_weight(w, hv, buckets):
    w_max, w_min = jnp.max(w), jnp.min(w)
    step = (w_max - w_min) / buckets
    hw = w
    for i in range(buckets):
        hw = jnp.where((w >= i * step + w_min) & (w < (i + 1) * step + w_min),
                       hv[i], hw)
    return jnp.where(w == w_max, hv[buckets - 1], hw)


def _ref_conv(x, w, padding):
    return jax.lax.conv_general_dilated(
        x, w, window_strides=(1, 1),
        padding=[(padding, padding), (padding, padding)],
        dimension_numbers=("NCHW", "OIHW", "NCHW"))


if __name__ == "__main__":
    # Module config: HashedConv2d(4, 8, kernel_size=3, padding=1, bias=False, buckets=4)
    N, CIN, H, W = 2, 4, 16, 16
    COUT, KSZ, PAD, BUCKETS = 8, 3, 1, 4

    key = jax.random.PRNGKey(0)
    k_x, k_xh, k_w, k_hv = jax.random.split(key, 4)
    x = jax.random.normal(k_x, (N, CIN, H, W), jnp.float32)
    x_hash = jax.random.normal(k_xh, (N, CIN, H, W), jnp.float32)
    conv_weight = jax.random.normal(k_w, (COUT, CIN, KSZ, KSZ), jnp.float32)
    hash_value = jnp.sort(jax.random.normal(k_hv, (BUCKETS,), jnp.float32))

    fwd = jax.jit(functools.partial(hashed_conv2d_forward,
                                    buckets=BUCKETS, padding=PAD))
    out, hash_out, out_hash = fwd(x, x_hash, conv_weight, hash_value)
    jax.block_until_ready((out, hash_out, out_hash))

    # correctness check against plain-JAX reference
    hw_ref = _ref_hash_weight(conv_weight, hash_value, BUCKETS)
    ref_out = _ref_conv(x, conv_weight, PAD)
    ref_hash_out = _ref_conv(x, hw_ref, PAD)
    ref_out_hash = _ref_conv(x_hash, hw_ref, PAD)
    assert out.shape == (N, COUT, H, W)
    assert jnp.allclose(out, ref_out, rtol=1e-4, atol=1e-3)
    assert jnp.allclose(hash_out, ref_hash_out, rtol=1e-4, atol=1e-3)
    assert jnp.allclose(out_hash, ref_out_hash, rtol=1e-4, atol=1e-3)

    print("KERNEL_OK")
</pallas_src>

<mosaic_0001>
module attributes {stable_mosaic.version = 11 : i64} {
  func.func @_fused_hashed_conv_kernel(%arg0: i32, %arg1: i32, %arg2: memref<8x36xf32, #tpu.memory_space<vmem>>, %arg3: memref<4xf32, #tpu.memory_space<smem>>, %arg4: memref<36x512xf32, #tpu.memory_space<vmem>>, %arg5: memref<36x512xf32, #tpu.memory_space<vmem>>, %arg6: memref<16x512xf32, #tpu.memory_space<vmem>>, %arg7: memref<8x512xf32, #tpu.memory_space<vmem>>, %arg8: memref<16x36xf32, #tpu.memory_space<vmem>>) attributes {dimension_semantics = [#tpu.dimension_semantics<parallel>, #tpu.dimension_semantics<arbitrary>], iteration_bounds = array<i64: 1, 1>, scalar_prefetch = 0 : i64, scratch_operands = 1 : i64, tpu.core_type = #tpu.core_type<tc>, window_params = [{pipeline_mode = #tpu.pipeline_mode<synchronous>, transform_indices = @transform_0, window_bounds = array<i64: 8, 36>}, {transform_indices = @transform_1, window_bounds = array<i64: 4>}, {transform_indices = @transform_2, window_bounds = array<i64: 36, 512>}, {transform_indices = @transform_3, window_bounds = array<i64: 36, 512>}, {transform_indices = @transform_4, window_bounds = array<i64: 16, 512>}, {transform_indices = @transform_5, window_bounds = array<i64: 8, 512>}]} {
    %c0_i32 = arith.constant 0 : i32
    %0 = arith.cmpi eq, %arg1, %c0_i32 : i32
    %1 = arith.extui %0 : i1 to i32
    %c0_i32_0 = arith.constant 0 : i32
    %2 = arith.cmpi ne, %1, %c0_i32_0 : i32
    scf.if %2 {
      %c0_11 = arith.constant 0 : index
      %c0_12 = arith.constant 0 : index
      %11 = vector.load %arg2[%c0_11, %c0_12] : memref<8x36xf32, #tpu.memory_space<vmem>>, vector<8x36xf32>
      %12 = vector.shape_cast %11 : vector<8x36xf32> to vector<1x8x36xf32>
      %cst_13 = arith.constant dense<0xFF800000> : vector<1xf32>
      %13 = vector.multi_reduction <maximumf>, %12, %cst_13 [1, 2] : vector<1x8x36xf32> to vector<1xf32>
      %14 = vector.shape_cast %13 : vector<1xf32> to vector<1x1x1xf32>
      %15 = vector.extract %14[0, 0, 0] : f32 from vector<1x1x1xf32>
      %16 = vector.shape_cast %11 : vector<8x36xf32> to vector<1x8x36xf32>
      %cst_14 = arith.constant dense<0x7F800000> : vector<1xf32>
      %17 = vector.multi_reduction <minimumf>, %16, %cst_14 [1, 2] : vector<1x8x36xf32> to vector<1xf32>
      %18 = vector.shape_cast %17 : vector<1xf32> to vector<1x1x1xf32>
      %19 = vector.extract %18[0, 0, 0] : f32 from vector<1x1x1xf32>
      %20 = arith.subf %15, %19 : f32
      %cst_15 = arith.constant 4.000000e+00 : f32
      %21 = arith.divf %20, %cst_15 : f32
      %cst_16 = arith.constant 0.000000e+00 : f32
      %22 = arith.mulf %cst_16, %21 : f32
      %23 = arith.addf %22, %19 : f32
      %cst_17 = arith.constant 1.000000e+00 : f32
      %24 = arith.mulf %cst_17, %21 : f32
      %25 = arith.addf %24, %19 : f32
      %26 = vector.broadcast %23 : f32 to vector<8x36xf32>
      %27 = arith.cmpf oge, %11, %26 : vector<8x36xf32>
      %28 = vector.broadcast %25 : f32 to vector<8x36xf32>
      %29 = arith.cmpf olt, %11, %28 : vector<8x36xf32>
      %30 = arith.andi %27, %29 : vector<8x36xi1>
      %c0_18 = arith.constant 0 : index
      %31 = memref.load %arg3[%c0_18] : memref<4xf32, #tpu.memory_space<smem>>
      %32 = vector.broadcast %31 : f32 to vector<8x36xf32>
      %33 = arith.select %30, %32, %11 : vector<8x36xi1>, vector<8x36xf32>
      %cst_19 = arith.constant 1.000000e+00 : f32
      %34 = arith.mulf %cst_19, %21 : f32
      %35 = arith.addf %34, %19 : f32
      %cst_20 = arith.constant 2.000000e+00 : f32
      %36 = arith.mulf %cst_20, %21 : f32
      %37 = arith.addf %36, %19 : f32
      %38 = vector.broadcast %35 : f32 to vector<8x36xf32>
      %39 = arith.cmpf oge, %11, %38 : vector<8x36xf32>
      %40 = vector.broadcast %37 : f32 to vector<8x36xf32>
      %41 = arith.cmpf olt, %11, %40 : vector<8x36xf32>
      %42 = arith.andi %39, %41 : vector<8x36xi1>
      %c1 = arith.constant 1 : index
      %43 = memref.load %arg3[%c1] : memref<4xf32, #tpu.memory_space<smem>>
      %44 = vector.broadcast %43 : f32 to vector<8x36xf32>
      %45 = arith.select %42, %44, %33 : vector<8x36xi1>, vector<8x36xf32>
      %cst_21 = arith.constant 2.000000e+00 : f32
      %46 = arith.mulf %cst_21, %21 : f32
      %47 = arith.addf %46, %19 : f32
      %cst_22 = arith.constant 3.000000e+00 : f32
      %48 = arith.mulf %cst_22, %21 : f32
      %49 = arith.addf %48, %19 : f32
      %50 = vector.broadcast %47 : f32 to vector<8x36xf32>
      %51 = arith.cmpf oge, %11, %50 : vector<8x36xf32>
      %52 = vector.broadcast %49 : f32 to vector<8x36xf32>
      %53 = arith.cmpf olt, %11, %52 : vector<8x36xf32>
      %54 = arith.andi %51, %53 : vector<8x36xi1>
      %c2 = arith.constant 2 : index
      %55 = memref.load %arg3[%c2] : memref<4xf32, #tpu.memory_space<smem>>
      %56 = vector.broadcast %55 : f32 to vector<8x36xf32>
      %57 = arith.select %54, %56, %45 : vector<8x36xi1>, vector<8x36xf32>
      %cst_23 = arith.constant 3.000000e+00 : f32
      %58 = arith.mulf %cst_23, %21 : f32
      %59 = arith.addf %58, %19 : f32
      %cst_24 = arith.constant 4.000000e+00 : f32
      %60 = arith.mulf %cst_24, %21 : f32
      %61 = arith.addf %60, %19 : f32
      %62 = vector.broadcast %59 : f32 to vector<8x36xf32>
      %63 = arith.cmpf oge, %11, %62 : vector<8x36xf32>
      %64 = vector.broadcast %61 : f32 to vector<8x36xf32>
      %65 = arith.cmpf olt, %11, %64 : vector<8x36xf32>
      %66 = arith.andi %63, %65 : vector<8x36xi1>
      %c3 = arith.constant 3 : index
      %67 = memref.load %arg3[%c3] : memref<4xf32, #tpu.memory_space<smem>>
      %68 = vector.broadcast %67 : f32 to vector<8x36xf32>
      %69 = arith.select %66, %68, %57 : vector<8x36xi1>, vector<8x36xf32>
      %70 = vector.broadcast %15 : f32 to vector<8x36xf32>
      %71 = arith.cmpf oeq, %11, %70 : vector<8x36xf32>
      %c3_25 = arith.constant 3 : index
      %72 = memref.load %arg3[%c3_25] : memref<4xf32, #tpu.memory_space<smem>>
      %73 = vector.broadcast %72 : f32 to vector<8x36xf32>
      %74 = arith.select %71, %73, %69 : vector<8x36xi1>, vector<8x36xf32>
      %c0_26 = arith.constant 0 : index
      %c0_27 = arith.constant 0 : index
      %75 = vector.load %arg8[%c0_26, %c0_27] : memref<16x36xf32, #tpu.memory_space<vmem>>, vector<8x36xf32>
      tpu.vector_store %arg8[%c0_26, %c0_27], %11 {strides = array<i32>} : memref<16x36xf32, #tpu.memory_space<vmem>>, vector<8x36xf32>,
      %c8 = arith.constant 8 : index
      %c0_28 = arith.constant 0 : index
      %76 = vector.load %arg8[%c8, %c0_28] : memref<16x36xf32, #tpu.memory_space<vmem>>, vector<8x36xf32>
      tpu.vector_store %arg8[%c8, %c0_28], %74 {strides = array<i32>} : memref<16x36xf32, #tpu.memory_space<vmem>>, vector<8x36xf32>,
    } else {
    }
    %c0 = arith.constant 0 : index
    %c0_1 = arith.constant 0 : index
    %3 = vector.load %arg8[%c0, %c0_1] : memref<16x36xf32, #tpu.memory_space<vmem>>, vector<16x36xf32>
    %c0_2 = arith.constant 0 : index
    %c0_3 = arith.constant 0 : index
    %4 = vector.load %arg4[%c0_2, %c0_3] : memref<36x512xf32, #tpu.memory_space<vmem>>, vector<36x512xf32>
    %cst = arith.constant dense<0.000000e+00> : vector<16x512xf32>
    %5 = tpu.matmul %3, %4, %cst {dimension_numbers = #tpu.dot_dimension_numbers<[1], [0], [0], [1], [0, 0, 1, 1], [], []>} : vector<16x36xf32>, vector<36x512xf32>, vector<16x512xf32> -> vector<16x512xf32>
    %c0_4 = arith.constant 0 : index
    %c0_5 = arith.constant 0 : index
    %6 = vector.load %arg6[%c0_4, %c0_5] : memref<16x512xf32, #tpu.memory_space<vmem>>, vector<16x512xf32>
    tpu.vector_store %arg6[%c0_4, %c0_5], %5 {strides = array<i32>} : memref<16x512xf32, #tpu.memory_space<vmem>>, vector<16x512xf32>,
    %7 = vector.extract_strided_slice %3 {offsets = [8, 0], sizes = [8, 36], strides = [1, 1]} : vector<16x36xf32> to vector<8x36xf32>
    %c0_6 = arith.constant 0 : index
    %c0_7 = arith.constant 0 : index
    %8 = vector.load %arg5[%c0_6, %c0_7] : memref<36x512xf32, #tpu.memory_space<vmem>>, vector<36x512xf32>
    %cst_8 = arith.constant dense<0.000000e+00> : vector<8x512xf32>
    %9 = tpu.matmul %7, %8, %cst_8 {dimension_numbers = #tpu.dot_dimension_numbers<[1], [0], [0], [1], [0, 0, 1, 1], [], []>} : vector<8x36xf32>, vector<36x512xf32>, vector<8x512xf32> -> vector<8x512xf32>
    %c0_9 = arith.constant 0 : index
    %c0_10 = arith.constant 0 : index
    %10 = vector.load %arg7[%c0_9, %c0_10] : memref<8x512xf32, #tpu.memory_space<vmem>>, vector<8x512xf32>
    tpu.vector_store %arg7[%c0_9, %c0_10], %9 {strides = array<i32>} : memref<8x512xf32, #tpu.memory_space<vmem>>, vector<8x512xf32>,
    return
  }
  func.func @transform_0(%arg0: i32, %arg1: i32) -> (i32, i32) {
    %c0_i32 = arith.constant 0 : i32
    %c0_i32_0 = arith.constant 0 : i32
    %c0_i32_1 = arith.constant 0 : i32
    return %c0_i32, %c0_i32_0 : i32, i32
  }
  func.func @transform_1(%arg0: i32, %arg1: i32) -> i32 {
    %c0_i32 = arith.constant 0 : i32
    %c0_i32_0 = arith.constant 0 : i32
    return %c0_i32 : i32
  }
  func.func @transform_2(%arg0: i32, %arg1: i32) -> (i32, i32) {
    %c1_i32 = arith.constant 1 : i32
    %0 = arith.muli %arg0, %c1_i32 : i32
    %1 = arith.addi %0, %arg1 : i32
    %c0_i32 = arith.constant 0 : i32
    %c0_i32_0 = arith.constant 0 : i32
    return %c0_i32, %1 : i32, i32
  }
  func.func @transform_3(%arg0: i32, %arg1: i32) -> (i32, i32) {
    %c1_i32 = arith.constant 1 : i32
    %0 = arith.muli %arg0, %c1_i32 : i32
    %1 = arith.addi %0, %arg1 : i32
    %c0_i32 = arith.constant 0 : i32
    %c0_i32_0 = arith.constant 0 : i32
    return %c0_i32, %1 : i32, i32
  }
  func.func @transform_4(%arg0: i32, %arg1: i32) -> (i32, i32) {
    %c1_i32 = arith.constant 1 : i32
    %0 = arith.muli %arg0, %c1_i32 : i32
    %1 = arith.addi %0, %arg1 : i32
    %c0_i32 = arith.constant 0 : i32
    %c0_i32_0 = arith.constant 0 : i32
    return %c0_i32, %1 : i32, i32
  }
  func.func @transform_5(%arg0: i32, %arg1: i32) -> (i32, i32) {
    %c1_i32 = arith.constant 1 : i32
    %0 = arith.muli %arg0, %c1_i32 : i32
    %1 = arith.addi %0, %arg1 : i32
    %c0_i32 = arith.constant 0 : i32
    %c0_i32_0 = arith.constant 0 : i32
    return %c0_i32, %1 : i32, i32
  }
}

</mosaic_0001>

<llo_original>
// kernel: hashed_conv2d_forward.1
$region0: #{hashed_conv2d_forward.1}
  #allocation0 [shape = 'u32[]', space=smem, size = 0x4, offset = 0x4, fixed_abs, tag = 'smem constant byte address 0x4 - core index']
  #allocation1 [shape = 'u32[144,128]{1,0:T(1,128)}', space=vmem, size = 0x12000, scoped, tag = 'internal scratch']
  #allocation2 [shape = 'f32[16,36]{1,0:T(8,128)}', space=vmem, size = 0x2000, scoped, tag = 'scratch operand']
  %s0 = inlined_call_operand.vmem [shape: f32[8,36], index: 0, kind: input, shape index: {}]
  %s1 = inlined_call_operand.vmem [shape: f32[4], index: 1, kind: input, shape index: {}]
  %s2 = inlined_call_operand.vmem [shape: f32[36,512], index: 2, kind: input, shape index: {}]
  %s3 = inlined_call_operand.vmem [shape: f32[36,512], index: 3, kind: input, shape index: {}]
  %s4 = inlined_call_operand.vmem [shape: f32[16,512], index: 4, kind: output, shape index: {0}]
  %s5 = inlined_call_operand.vmem [shape: f32[8,512], index: 5, kind: output, shape index: {1}]
  %6 = xla_tuple %s4, %s5
  %s7 = sld [smem:[#allocation0]]
  $region42: #{hashed_conv2d_forward.1} parent=0
    _
  %s9 = ssub.s32 1, %s7
  %s10 = scalar_select 0, %s9, %s7
  $region1: #{hashed_conv2d_forward.1} parent=0
    #allocation3 [shape = 'u8[512]{0}', space=smem, size = 0x200, scoped, tag = 'input window, operand 1, single buffered']
    #allocation4 [shape = 's32[1]{0}', space=sflag, size = 0x4, scoped, tag = 'scoped memory for hashed_conv2d_forward.1']
    %11 = vsyncpa [#allocation4], 0
    // Predicated region
    $region2: #{hashed_conv2d_forward.1} parent=1 // pred_check
      _
    $region3: #{hashed_conv2d_forward.1} parent=1 // pred_check_branch
      %13 = sbr.rel (0) target = $region5
    $region4: #{hashed_conv2d_forward.1} parent=1 // pred_region
      _
    $region5: #{hashed_conv2d_forward.1} parent=1 // pred_fallthru
      _
    // Predicated region
    $region6: #{hashed_conv2d_forward.1} parent=1 // pred_check
      _
    $region7: #{hashed_conv2d_forward.1} parent=1 // pred_check_branch
      %15 = sbr.rel (0) target = $region9
    $region8: #{hashed_conv2d_forward.1} parent=1 // pred_region
      %s17 = ssub.s32 16, 16
      %18 = vsyncadd [#allocation4], %s17
      %s20 = sshll.u32 %s1, 4
      %s21 = int_to_ptr.vmem [resolvable:$true] %s20
      %23 = dma.vmem_to_smem %s21, 16, [#allocation3], [#allocation4]
    $region9: #{hashed_conv2d_forward.1} parent=1 // pred_fallthru
      _
    // Predicated region
    $region10: #{hashed_conv2d_forward.1} parent=1 // pred_check
      _
    $region11: #{hashed_conv2d_forward.1} parent=1 // pred_check_branch
      %25 = sbr.rel (0) target = $region13
    $region12: #{hashed_conv2d_forward.1} parent=1 // pred_region
      %s26 = sadd.s32 0, 0
      %s27 = smul.u32 4, %s26
      %p28 = scmp.lt.s32.totalorder %s27, 3
      %s29 = scalar_select %p28, %s27, 3
      %s30 = smul.addr %s29, 8
      %s31 = scalar_lea.vmem %s2, %s30
      %s32 = sadd.s32 0, 0
      %s33 = smul.u32 4, %s32
    $region13: #{hashed_conv2d_forward.1} parent=1 // pred_fallthru
      _
    // Predicated region
    $region14: #{hashed_conv2d_forward.1} parent=1 // pred_check
      _
    $region15: #{hashed_conv2d_forward.1} parent=1 // pred_check_branch
      %35 = sbr.rel (0) target = $region17
    $region16: #{hashed_conv2d_forward.1} parent=1 // pred_region
      %s36 = sadd.s32 0, 0
      %s37 = smul.u32 4, %s36
      %p38 = scmp.lt.s32.totalorder %s37, 3
      %s39 = scalar_select %p38, %s37, 3
      %s40 = smul.addr %s39, 8
      %s41 = scalar_lea.vmem %s3, %s40
      %s42 = sadd.s32 0, 0
      %s43 = smul.u32 4, %s42
    $region17: #{hashed_conv2d_forward.1} parent=1 // pred_fallthru
      _
    // Predicated region
    $region18: #{hashed_conv2d_forward.1} parent=1 // pred_check
      _
    $region19: #{hashed_conv2d_forward.1} parent=1 // pred_check_branch
      %45 = sbr.rel (0) target = $region21
    $region20: #{hashed_conv2d_forward.1} parent=1 // pred_region
      %46 = dma.done [#allocation4], 16
    $region21: #{hashed_conv2d_forward.1} parent=1 // pred_fallthru
      _
    %47 = sfence
    %s48 = sadd.s32 0, 0
    %s49 = smul.u32 4, %s48
    %p50 = scmp.lt.s32.totalorder %s49, 3
    %s51 = scalar_select %p50, %s49, 3
    %s52 = smul.addr %s51, 8
    %s53 = scalar_lea.vmem %s2, %s52
    %s54 = sadd.s32 0, 0
    %s55 = smul.u32 4, %s54
    %p56 = scmp.lt.s32.totalorder %s55, 3
    %s57 = scalar_select %p56, %s55, 3
    %s58 = smul.addr %s57, 8
    %s59 = scalar_lea.vmem %s3, %s58
    %s60 = sadd.s32 0, 0
    %s61 = smul.u32 4, %s60
    %p62 = scmp.lt.s32.totalorder %s61, 3
    %s63 = scalar_select %p62, %s61, 3
    %s64 = smul.addr %s63, 8
    %s65 = scalar_lea.vmem %s4, %s64
    %s66 = sadd.s32 0, 0
    %s67 = smul.u32 4, %s66
    %p68 = scmp.lt.s32.totalorder %s67, 3
    %s69 = scalar_select %p68, %s67, 3
    %s70 = smul.addr %s69, 8
    %s71 = scalar_lea.vmem %s5, %s70
    %s72 = sadd.s32 0, 0
    %s73 = smul.u32 4, %s72
    %p74 = scmp.lt.s32.totalorder %s73, 3
    %s75 = scalar_select %p74, %s73, 3
    %s76 = smul.addr %s75, 8
    %s77 = scalar_lea.vmem %s2, %s76
    %s78 = sadd.s32 0, 0
    %s79 = smul.u32 4, %s78
    %s80 = sadd.s32 0, 0
    %s81 = smul.u32 4, %s80
    %p82 = scmp.lt.s32.totalorder %s81, 3
    %s83 = scalar_select %p82, %s81, 3
    %s84 = smul.addr %s83, 8
    %s85 = scalar_lea.vmem %s3, %s84
    %s86 = sadd.s32 0, 0
    %s87 = smul.u32 4, %s86
    %s88 = sadd.s32 0, 0
    %s89 = smul.u32 4, %s88
    %p90 = scmp.lt.s32.totalorder %s89, 3
    %s91 = scalar_select %p90, %s89, 3
    %s92 = smul.addr %s91, 8
    %s93 = scalar_lea.vmem %s4, %s92
    %s94 = sadd.s32 0, 0
    %s95 = smul.u32 4, %s94
    %s96 = sadd.s32 0, 0
    %s97 = smul.u32 4, %s96
    %p98 = scmp.lt.s32.totalorder %s97, 3
    %s99 = scalar_select %p98, %s97, 3
    %s100 = smul.addr %s99, 8
    %s101 = scalar_lea.vmem %s5, %s100
    %s102 = sadd.s32 0, 0
    %s103 = smul.u32 4, %s102
    %p104 = scmp.eq.s32.totalorder 0, 0
    // Predicated region
    $region22: #{hashed_conv2d_forward.1} parent=1 // pred_check
      %p105 = pneg %p104
    $region23: #{hashed_conv2d_forward.1} parent=1 // pred_check_branch
      %107 = sbr.rel (%p105) target = $region25
    $region24: #{hashed_conv2d_forward.1} parent=1 // pred_region
      %v108 = vld [vmem:[%s0] sm:$0xff]
      %vm109 = vcmask 293888
      %v110 = vsel %vm109, %v108, -inf
      %111 = vmax.xlane.f32.xlu0 %v110
      %v112 = vpop.xlane.xlu0 %111
      %v113 = vrot.slane %v112, 4
      %v114 = vmax.f32 %v112, %v113
      %v115 = vrot.slane %v114, 2
      %v116 = vmax.f32 %v114, %v115
      %v117 = vrot.slane %v116, 1
      %v118 = vmax.f32 %v116, %v117
      %s119 = vtos %v118
      %v120 = vsel %vm109, %v108, inf
      %121 = vmin.xlane.f32.xlu0 %v120
      %v122 = vpop.xlane.xlu0 %121
      %v123 = vrot.slane %v122, 4
      %v124 = vmin.f32 %v122, %v123
      %v125 = vrot.slane %v124, 2
      %v126 = vmin.f32 %v124, %v125
      %v127 = vrot.slane %v126, 1
      %v128 = vmin.f32 %v126, %v127
      %s129 = vtos %v128
      %s130 = ssub.f32 %s119, %s129
      %v131 = vrcp.pop 4.0
      %s132 = vtos %v131
      %s133 = smul.f32 %s130, %s132
      %s134 = smul.f32 %s133, 0.0
      %s135 = sadd.f32 %s134, %s129
      %s136 = sadd.f32 %s133, %s129
      %v137 = vstv %s135
      %vm138 = vcmp.ge.f32.partialorder %v108, %v137
      %v139 = vstv %s136
      %vm140 = vcmp.lt.f32.partialorder %v108, %v139
      %vm141 = vmand %vm138, %vm140
      %s142 = sld [smem:[#allocation3]]
      %v143 = vstv %s142
      %v144 = vsel %vm141, %v143, %v108
      %s145 = smul.f32 %s133, 2.0
      %s146 = sadd.f32 %s145, %s129
      %vm147 = vcmp.ge.f32.partialorder %v108, %v139
      %v148 = vstv %s146
      %vm149 = vcmp.lt.f32.partialorder %v108, %v148
      %vm150 = vmand %vm147, %vm149
      %s151 = sld [smem:[#allocation3 + $0x1]]
      %v152 = vstv %s151
      %v153 = vsel %vm150, %v152, %v144
      %s154 = smul.f32 %s133, 3.0
      %s155 = sadd.f32 %s154, %s129
      %vm156 = vcmp.ge.f32.partialorder %v108, %v148
      %v157 = vstv %s155
      %vm158 = vcmp.lt.f32.partialorder %v108, %v157
      %vm159 = vmand %vm156, %vm158
      %s160 = sld [smem:[#allocation3 + $0x2]]
      %v161 = vstv %s160
      %v162 = vsel %vm159, %v161, %v153
      %s163 = smul.f32 %s133, 4.0
      %s164 = sadd.f32 %s163, %s129
      %vm165 = vcmp.ge.f32.partialorder %v108, %v157
      %v166 = vstv %s164
      %vm167 = vcmp.lt.f32.partialorder %v108, %v166
      %vm168 = vmand %vm165, %vm167
      %s169 = sld [smem:[#allocation3 + $0x3]]
      %v170 = vstv %s169
      %v171 = vsel %vm168, %v170, %v162
      %v172 = vstv %s119
      %vm173 = vcmp.eq.f32.partialorder %v108, %v172
      %v174 = vsel %vm173, %v170, %v171
      %175 = vst.msk [vmem:[#allocation2] sm:$0xff] %vm109, %v108
      %176 = vst.msk [vmem:[#allocation2 + $0x8] sm:$0xff] %vm109, %v174
    $region25: #{hashed_conv2d_forward.1} parent=1 // pred_fallthru
      _
    %v177 = vld [vmem:[#allocation2] sm:$0xff]
    %v178 = vld [vmem:[#allocation2 + $0x8] sm:$0xff]
    %v179 = vld [vmem:[%s77] sm:$0xff]
    %v180 = vld [vmem:[%s77 + $0x8] sm:$0xff]
    %v181 = vld [vmem:[%s77 + $0x10] sm:$0xff]
    %v182 = vld [vmem:[%s77 + $0x18] sm:$0xff]
    %v183 = vld [vmem:[%s77 + $0x20] sm:$0xff]
    %v184 = vld [vmem:[%s77 + $0x28] sm:$0xff]
    %v185 = vld [vmem:[%s77 + $0x30] sm:$0xff]
    %v186 = vld [vmem:[%s77 + $0x38] sm:$0xff]
    %v187 = vld [vmem:[%s77 + $0x40] sm:$0xff]
    %v188 = vld [vmem:[%s77 + $0x48] sm:$0xff]
    %v189 = vld [vmem:[%s77 + $0x50] sm:$0xff]
    %v190 = vld [vmem:[%s77 + $0x58] sm:$0xff]
    %v191 = vld [vmem:[%s77 + $0x60] sm:$0xff]
    %v192 = vld [vmem:[%s77 + $0x68] sm:$0xff]
    %v193 = vld [vmem:[%s77 + $0x70] sm:$0xff]
    %v194 = vld [vmem:[%s77 + $0x78] sm:$0xff]
    %v195 = vld [vmem:[%s77 + $0x80] sm:$0xf]
    %v196 = vld [vmem:[%s77 + $0x88] sm:$0xf]
    %v197 = vld [vmem:[%s77 + $0x90] sm:$0xf]
    %v198 = vld [vmem:[%s77 + $0x98] sm:$0xf]
    %vm199 = vcmask 293888
    %v201 = vsel %vm199, %v177, 0
    %v204 = vsel %vm199, %v178, 0
    %vm206 = vcmask 1043456
    %v208 = vsel %vm206, %v195, 0
    %v211 = vsel %vm206, %v196, 0
    %v214 = vsel %vm206, %v197, 0
    %v217 = vsel %vm206, %v198, 0
    %219 = vmatprep.subr.mxu0 %v180
    %220 = vmatpush1.msra.mxu0 %v179
    %221 = vmatprep.subr.mxu0 %v184
    %222 = vmatpush1.msra.mxu0 %v183
    %223 = vmatprep.subr.mxu0 %v188
    %224 = vmatpush1.msra.mxu0 %v187
    %225 = vmatprep.subr.mxu0 %v192
    %226 = vmatpush1.msra.mxu0 %v191
    %227 = vmatprep.subr.mxu0 %v211
    %228 = vmatpush1.msra.mxu0 %v208
    %229 = vmatprep.subr.mxu0 0.0
    %230 = vmatpush1.msra.mxu0 0.0
    %231 = vmatprep.subr.mxu0 0.0
    %232 = vmatpush1.msra.mxu0 0.0
    %233 = vmatprep.subr.mxu0 0.0
    %234 = vmatpush1.msra.mxu0 0.0
    %235 = vmatprep.subr.mxu0 0.0
    %236 = vmatpush1.msra.mxu0 0.0
    %237 = vmatprep.subr.mxu0 0.0
    %238 = vmatpush1.msra.mxu0 0.0
    %239 = vmatprep.subr.mxu0 0.0
    %240 = vmatpush1.msra.mxu0 0.0
    %241 = vmatprep.subr.mxu0 0.0
    %242 = vmatpush1.msra.mxu0 0.0
    %243 = vmatprep.subr.mxu0 0.0
    %244 = vmatpush1.msra.mxu0 0.0
    %245 = vmatprep.subr.mxu0 0.0
    %246 = vmatpush1.msra.mxu0 0.0
    %247 = vmatprep.subr.mxu0 0.0
    %248 = vmatpush1.msra.mxu0 0.0
    %249 = vmatprep.subr.mxu0 0.0
    %250 = vmatpush1.msra.mxu0 0.0
    %251 = vmatprep.subr.mxu0 0.0
    %252 = vmatpush1.msra.mxu0 0.0
    %253 = vmatprep.subr.mxu0 0.0
    %254 = vmatpush1.msra.mxu0 0.0
    %255 = vmatprep.subr.mxu0 0.0
    %256 = vmatpush1.msra.mxu0 0.0
    %257 = vmatprep.subr.mxu0 0.0
    %258 = vmatpush1.msra.mxu0 0.0
    %259 = vmatprep.subr.mxu0 0.0
    %260 = vmatpush1.msra.mxu0 0.0
    %261 = vmatprep.subr.mxu0 0.0
    %262 = vmatpush1.msra.mxu0 0.0
    %263 = vmatprep.subr.mxu0 0.0
    %264 = vmatpush1.msra.mxu0 0.0
    %265 = vmatprep.subr.mxu0 0.0
    %266 = vmatpush1.msra.mxu0 0.0
    %267 = vmatprep.subr.mxu0 0.0
    %268 = vmatpush1.msra.mxu0 0.0
    %269 = vmatprep.subr.mxu0 0.0
    %270 = vmatpush1.msra.mxu0 0.0
    %271 = vmatprep.subr.mxu0 0.0
    %272 = vmatpush1.msra.mxu0 0.0
    %273 = vmatprep.subr.mxu0 0.0
    %274 = vmatpush1.msra.mxu0 0.0
    %275 = vmatprep.subr.mxu0 0.0
    %276 = vmatpush1.msra.mxu0 0.0
    %277 = vmatprep.subr.mxu0 0.0
    %278 = vmatpush1.msra.mxu0 0.0
    %279 = vmatprep.subr.mxu0 0.0
    %280 = vmatpush1.msra.mxu0 0.0
    %281 = vmatprep.subr.mxu0 0.0
    %282 = vmatpush1.msra.mxu0 0.0
    %283 = vmatprep.mubr.f32.mxu0 0.0
    %284 = vmatmul.mubr.f32.gmra.mrb[0].mxu0 %v201
    %v285 = vpop.f32.mrb[0].mxu0
    %v286 = vadd.f32 0.0, %v285
    %v287 = vpop.f32.mrb[0].mxu0
    %v288 = vadd.f32 0.0, %v287
    %289 = vmatprep.mubr.f32.mxu0 0.0
    %290 = vmatmul.mubr.f32.gmra.mrb[0].mxu0 %v204
    %v291 = vpop.f32.mrb[0].mxu0
    %v292 = vadd.f32 0.0, %v291
    %v293 = vpop.f32.mrb[0].mxu0
    %v294 = vadd.f32 0.0, %v293
    %295 = vdwg.mxu0
    %296 = vmatprep.subr.mxu0 %v182
    %297 = vmatpush1.msra.mxu0 %v181
    %298 = vmatprep.subr.mxu0 %v186
    %299 = vmatpush1.msra.mxu0 %v185
    %300 = vmatprep.subr.mxu0 %v190
    %301 = vmatpush1.msra.mxu0 %v189
    %302 = vmatprep.subr.mxu0 %v194
    %303 = vmatpush1.msra.mxu0 %v193
    %304 = vmatprep.subr.mxu0 %v217
    %305 = vmatpush1.msra.mxu0 %v214
    %306 = vmatprep.subr.mxu0 0.0
    %307 = vmatpush1.msra.mxu0 0.0
    %308 = vmatprep.subr.mxu0 0.0
    %309 = vmatpush1.msra.mxu0 0.0
    %310 = vmatprep.subr.mxu0 0.0
    %311 = vmatpush1.msra.mxu0 0.0
    %312 = vmatprep.subr.mxu0 0.0
    %313 = vmatpush1.msra.mxu0 0.0
    %314 = vmatprep.subr.mxu0 0.0
    %315 = vmatpush1.msra.mxu0 0.0
    %316 = vmatprep.subr.mxu0 0.0
    %317 = vmatpush1.msra.mxu0 0.0
    %318 = vmatprep.subr.mxu0 0.0
    %319 = vmatpush1.msra.mxu0 0.0
    %320 = vmatprep.subr.mxu0 0.0
    %321 = vmatpush1.msra.mxu0 0.0
    %322 = vmatprep.subr.mxu0 0.0
    %323 = vmatpush1.msra.mxu0 0.0
    %324 = vmatprep.subr.mxu0 0.0
    %325 = vmatpush1.msra.mxu0 0.0
    %326 = vmatprep.subr.mxu0 0.0
    %327 = vmatpush1.msra.mxu0 0.0
    %328 = vmatprep.subr.mxu0 0.0
    %329 = vmatpush1.msra.mxu0 0.0
    %330 = vmatprep.subr.mxu0 0.0
    %331 = vmatpush1.msra.mxu0 0.0
    %332 = vmatprep.subr.mxu0 0.0
    %333 = vmatpush1.msra.mxu0 0.0
    %334 = vmatprep.subr.mxu0 0.0
    %335 = vmatpush1.msra.mxu0 0.0
    %336 = vmatprep.subr.mxu0 0.0
    %337 = vmatpush1.msra.mxu0 0.0
    %338 = vmatprep.subr.mxu0 0.0
    %339 = vmatpush1.msra.mxu0 0.0
    %340 = vmatprep.subr.mxu0 0.0
    %341 = vmatpush1.msra.mxu0 0.0
    %342 = vmatprep.subr.mxu0 0.0
    %343 = vmatpush1.msra.mxu0 0.0
    %344 = vmatprep.subr.mxu0 0.0
    %345 = vmatpush1.msra.mxu0 0.0
    %346 = vmatprep.subr.mxu0 0.0
    %347 = vmatpush1.msra.mxu0 0.0
    %348 = vmatprep.subr.mxu0 0.0
    %349 = vmatpush1.msra.mxu0 0.0
    %350 = vmatprep.subr.mxu0 0.0
    %351 = vmatpush1.msra.mxu0 0.0
    %352 = vmatprep.subr.mxu0 0.0
    %353 = vmatpush1.msra.mxu0 0.0
    %354 = vmatprep.subr.mxu0 0.0
    %355 = vmatpush1.msra.mxu0 0.0
    %356 = vmatprep.subr.mxu0 0.0
    %357 = vmatpush1.msra.mxu0 0.0
    %358 = vmatprep.subr.mxu0 0.0
    %359 = vmatpush1.msra.mxu0 0.0
    %360 = vmatprep.mubr.f32.mxu0 0.0
    %361 = vmatmul.mubr.f32.gmra.mrb[0].mxu0 %v201
    %v362 = vpop.f32.mrb[0].mxu0
    %v363 = vadd.f32 0.0, %v362
    %v364 = vpop.f32.mrb[0].mxu0
    %v365 = vadd.f32 0.0, %v364
    %366 = vmatprep.mubr.f32.mxu0 0.0
    %367 = vmatmul.mubr.f32.gmra.mrb[0].mxu0 %v204
    %v368 = vpop.f32.mrb[0].mxu0
    %v369 = vadd.f32 0.0, %v368
    %v370 = vpop.f32.mrb[0].mxu0
    %v371 = vadd.f32 0.0, %v370
    %372 = vdwg.mxu0
    %373 = vst [vmem:[%s93] sm:$0xff] %v286
    %374 = vst [vmem:[%s93 + $0x8] sm:$0xff] %v288
    %375 = vst [vmem:[%s93 + $0x10] sm:$0xff] %v363
    %376 = vst [vmem:[%s93 + $0x18] sm:$0xff] %v365
    %377 = vst [vmem:[%s93 + $0x20] sm:$0xff] %v292
    %378 = vst [vmem:[%s93 + $0x28] sm:$0xff] %v294
    %379 = vst [vmem:[%s93 + $0x30] sm:$0xff] %v369
    %380 = vst [vmem:[%s93 + $0x38] sm:$0xff] %v371
    %v381 = vld [vmem:[%s85] sm:$0xff]
    %v382 = vld [vmem:[%s85 + $0x8] sm:$0xff]
    %v383 = vld [vmem:[%s85 + $0x10] sm:$0xff]
    %v384 = vld [vmem:[%s85 + $0x18] sm:$0xff]
    %v385 = vld [vmem:[%s85 + $0x20] sm:$0xff]
    %v386 = vld [vmem:[%s85 + $0x28] sm:$0xff]
    %v387 = vld [vmem:[%s85 + $0x30] sm:$0xff]
    %v388 = vld [vmem:[%s85 + $0x38] sm:$0xff]
    %v389 = vld [vmem:[%s85 + $0x40] sm:$0xff]
    %v390 = vld [vmem:[%s85 + $0x48] sm:$0xff]
    %v391 = vld [vmem:[%s85 + $0x50] sm:$0xff]
    %v392 = vld [vmem:[%s85 + $0x58] sm:$0xff]
    %v393 = vld [vmem:[%s85 + $0x60] sm:$0xff]
    %v394 = vld [vmem:[%s85 + $0x68] sm:$0xff]
    %v395 = vld [vmem:[%s85 + $0x70] sm:$0xff]
    %v396 = vld [vmem:[%s85 + $0x78] sm:$0xff]
    %v397 = vld [vmem:[%s85 + $0x80] sm:$0xf]
    %v398 = vld [vmem:[%s85 + $0x88] sm:$0xf]
    %v399 = vld [vmem:[%s85 + $0x90] sm:$0xf]
    %v400 = vld [vmem:[%s85 + $0x98] sm:$0xf]
    %v402 = vsel %vm206, %v397, 0
    %v405 = vsel %vm206, %v398, 0
    %v408 = vsel %vm206, %v399, 0
    %v411 = vsel %vm206, %v400, 0
    %413 = vmatprep.subr.mxu0 %v382
    %414 = vmatpush1.msra.mxu0 %v381
    %415 = vmatprep.subr.mxu0 %v386
    %416 = vmatpush1.msra.mxu0 %v385
    %417 = vmatprep.subr.mxu0 %v390
    %418 = vmatpush1.msra.mxu0 %v389
    %419 = vmatprep.subr.mxu0 %v394
    %420 = vmatpush1.msra.mxu0 %v393
    %421 = vmatprep.subr.mxu0 %v405
    %422 = vmatpush1.msra.mxu0 %v402
    %423 = vmatprep.subr.mxu0 0.0
    %424 = vmatpush1.msra.mxu0 0.0
    %425 = vmatprep.subr.mxu0 0.0
    %426 = vmatpush1.msra.mxu0 0.0
    %427 = vmatprep.subr.mxu0 0.0
    %428 = vmatpush1.msra.mxu0 0.0
    %429 = vmatprep.subr.mxu0 0.0
    %430 = vmatpush1.msra.mxu0 0.0
    %431 = vmatprep.subr.mxu0 0.0
    %432 = vmatpush1.msra.mxu0 0.0
    %433 = vmatprep.subr.mxu0 0.0
    %434 = vmatpush1.msra.mxu0 0.0
    %435 = vmatprep.subr.mxu0 0.0
    %436 = vmatpush1.msra.mxu0 0.0
    %437 = vmatprep.subr.mxu0 0.0
    %438 = vmatpush1.msra.mxu0 0.0
    %439 = vmatprep.subr.mxu0 0.0
    %440 = vmatpush1.msra.mxu0 0.0
    %441 = vmatprep.subr.mxu0 0.0
    %442 = vmatpush1.msra.mxu0 0.0
    %443 = vmatprep.subr.mxu0 0.0
    %444 = vmatpush1.msra.mxu0 0.0
    %445 = vmatprep.subr.mxu0 0.0
    %446 = vmatpush1.msra.mxu0 0.0
    %447 = vmatprep.subr.mxu0 0.0
    %448 = vmatpush1.msra.mxu0 0.0
    %449 = vmatprep.subr.mxu0 0.0
    %450 = vmatpush1.msra.mxu0 0.0
    %451 = vmatprep.subr.mxu0 0.0
    %452 = vmatpush1.msra.mxu0 0.0
    %453 = vmatprep.subr.mxu0 0.0
    %454 = vmatpush1.msra.mxu0 0.0
    %455 = vmatprep.subr.mxu0 0.0
    %456 = vmatpush1.msra.mxu0 0.0
    %457 = vmatprep.subr.mxu0 0.0
    %458 = vmatpush1.msra.mxu0 0.0
    %459 = vmatprep.subr.mxu0 0.0
    %460 = vmatpush1.msra.mxu0 0.0
    %461 = vmatprep.subr.mxu0 0.0
    %462 = vmatpush1.msra.mxu0 0.0
    %463 = vmatprep.subr.mxu0 0.0
    %464 = vmatpush1.msra.mxu0 0.0
    %465 = vmatprep.subr.mxu0 0.0
    %466 = vmatpush1.msra.mxu0 0.0
    %467 = vmatprep.subr.mxu0 0.0
    %468 = vmatpush1.msra.mxu0 0.0
    %469 = vmatprep.subr.mxu0 0.0
    %470 = vmatpush1.msra.mxu0 0.0
    %471 = vmatprep.subr.mxu0 0.0
    %472 = vmatpush1.msra.mxu0 0.0
    %473 = vmatprep.subr.mxu0 0.0
    %474 = vmatpush1.msra.mxu0 0.0
    %475 = vmatprep.subr.mxu0 0.0
    %476 = vmatpush1.msra.mxu0 0.0
    %477 = vmatprep.mubr.f32.mxu0 0.0
    %478 = vmatmul.mubr.f32.gmra.mrb[0].mxu0 %v204
    %v479 = vpop.f32.mrb[0].mxu0
    %v480 = vadd.f32 0.0, %v479
    %v481 = vpop.f32.mrb[0].mxu0
    %v482 = vadd.f32 0.0, %v481
    %483 = vdwg.mxu0
    %484 = vmatprep.subr.mxu0 %v384
    %485 = vmatpush1.msra.mxu0 %v383
    %486 = vmatprep.subr.mxu0 %v388
    %487 = vmatpush1.msra.mxu0 %v387
    %488 = vmatprep.subr.mxu0 %v392
    %489 = vmatpush1.msra.mxu0 %v391
    %490 = vmatprep.subr.mxu0 %v396
    %491 = vmatpush1.msra.mxu0 %v395
    %492 = vmatprep.subr.mxu0 %v411
    %493 = vmatpush1.msra.mxu0 %v408
    %494 = vmatprep.subr.mxu0 0.0
    %495 = vmatpush1.msra.mxu0 0.0
    %496 = vmatprep.subr.mxu0 0.0
    %497 = vmatpush1.msra.mxu0 0.0
    %498 = vmatprep.subr.mxu0 0.0
    %499 = vmatpush1.msra.mxu0 0.0
    %500 = vmatprep.subr.mxu0 0.0
    %501 = vmatpush1.msra.mxu0 0.0
    %502 = vmatprep.subr.mxu0 0.0
    %503 = vmatpush1.msra.mxu0 0.0
    %504 = vmatprep.subr.mxu0 0.0
    %505 = vmatpush1.msra.mxu0 0.0
    %506 = vmatprep.subr.mxu0 0.0
    %507 = vmatpush1.msra.mxu0 0.0
    %508 = vmatprep.subr.mxu0 0.0
    %509 = vmatpush1.msra.mxu0 0.0
    %510 = vmatprep.subr.mxu0 0.0
    %511 = vmatpush1.msra.mxu0 0.0
    %512 = vmatprep.subr.mxu0 0.0
    %513 = vmatpush1.msra.mxu0 0.0
    %514 = vmatprep.subr.mxu0 0.0
    %515 = vmatpush1.msra.mxu0 0.0
    %516 = vmatprep.subr.mxu0 0.0
    %517 = vmatpush1.msra.mxu0 0.0
    %518 = vmatprep.subr.mxu0 0.0
    %519 = vmatpush1.msra.mxu0 0.0
    %520 = vmatprep.subr.mxu0 0.0
    %521 = vmatpush1.msra.mxu0 0.0
    %522 = vmatprep.subr.mxu0 0.0
    %523 = vmatpush1.msra.mxu0 0.0
    %524 = vmatprep.subr.mxu0 0.0
    %525 = vmatpush1.msra.mxu0 0.0
    %526 = vmatprep.subr.mxu0 0.0
    %527 = vmatpush1.msra.mxu0 0.0
    %528 = vmatprep.subr.mxu0 0.0
    %529 = vmatpush1.msra.mxu0 0.0
    %530 = vmatprep.subr.mxu0 0.0
    %531 = vmatpush1.msra.mxu0 0.0
    %532 = vmatprep.subr.mxu0 0.0
    %533 = vmatpush1.msra.mxu0 0.0
    %534 = vmatprep.subr.mxu0 0.0
    %535 = vmatpush1.msra.mxu0 0.0
    %536 = vmatprep.subr.mxu0 0.0
    %537 = vmatpush1.msra.mxu0 0.0
    %538 = vmatprep.subr.mxu0 0.0
    %539 = vmatpush1.msra.mxu0 0.0
    %540 = vmatprep.subr.mxu0 0.0
    %541 = vmatpush1.msra.mxu0 0.0
    %542 = vmatprep.subr.mxu0 0.0
    %543 = vmatpush1.msra.mxu0 0.0
    %544 = vmatprep.subr.mxu0 0.0
    %545 = vmatpush1.msra.mxu0 0.0
    %546 = vmatprep.subr.mxu0 0.0
    %547 = vmatpush1.msra.mxu0 0.0
    %548 = vmatprep.mubr.f32.mxu0 0.0
    %549 = vmatmul.mubr.f32.gmra.mrb[0].mxu0 %v204
    %v550 = vpop.f32.mrb[0].mxu0
    %v551 = vadd.f32 0.0, %v550
    %v552 = vpop.f32.mrb[0].mxu0
    %v553 = vadd.f32 0.0, %v552
    %554 = vdwg.mxu0
    %555 = vst [vmem:[%s101] sm:$0xff] %v480
    %556 = vst [vmem:[%s101 + $0x8] sm:$0xff] %v482
    %557 = vst [vmem:[%s101 + $0x10] sm:$0xff] %v551
    %558 = vst [vmem:[%s101 + $0x18] sm:$0xff] %v553
    %s559 = sadd.s32 0, 0
    %s560 = smul.u32 4, %s559
    %p561 = scmp.lt.s32.totalorder %s560, 3
    %s562 = scalar_select %p561, %s560, 3
    %s563 = smul.addr %s562, 8
    %s564 = scalar_lea.vmem %s4, %s563
    %s565 = sadd.s32 0, 0
    %s566 = smul.u32 4, %s565
    %p567 = scmp.lt.s32.totalorder %s566, 3
    %s568 = scalar_select %p567, %s566, 3
    %s569 = smul.addr %s568, 8
    %s570 = scalar_lea.vmem %s5, %s569
    // Predicated region
    $region26: #{hashed_conv2d_forward.1} parent=1 // pred_check
      _
    $region27: #{hashed_conv2d_forward.1} parent=1 // pred_check_branch
      %572 = sbr.rel (0) target = $region29
    $region28: #{hashed_conv2d_forward.1} parent=1 // pred_region
      %s573 = sadd.s32 0, 0
      %s574 = smul.u32 4, %s573
    $region29: #{hashed_conv2d_forward.1} parent=1 // pred_fallthru
      _
    // Predicated region
    $region30: #{hashed_conv2d_forward.1} parent=1 // pred_check
      _
    $region31: #{hashed_conv2d_forward.1} parent=1 // pred_check_branch
      %576 = sbr.rel (0) target = $region33
    $region32: #{hashed_conv2d_forward.1} parent=1 // pred_region
      %s577 = sadd.s32 0, 0
      %s578 = smul.u32 4, %s577
    $region33: #{hashed_conv2d_forward.1} parent=1 // pred_fallthru
      _
    // Predicated region
    $region34: #{hashed_conv2d_forward.1} parent=1 // pred_check
      _
    $region35: #{hashed_conv2d_forward.1} parent=1 // pred_check_branch
      %580 = sbr.rel (0) target = $region37
    $region36: #{hashed_conv2d_forward.1} parent=1 // pred_region
      %s581 = sadd.s32 0, 0
      %s582 = smul.u32 4, %s581
      %p583 = scmp.lt.s32.totalorder %s582, 3
      %s584 = scalar_select %p583, %s582, 3
      %s585 = smul.addr %s584, 8
      %s586 = scalar_lea.vmem %s4, %s585
    $region37: #{hashed_conv2d_forward.1} parent=1 // pred_fallthru
      _
    // Predicated region
    $region38: #{hashed_conv2d_forward.1} parent=1 // pred_check
      _
    $region39: #{hashed_conv2d_forward.1} parent=1 // pred_check_branch
      %588 = sbr.rel (0) target = $region41
    $region40: #{hashed_conv2d_forward.1} parent=1 // pred_region
      %s589 = sadd.s32 0, 0
      %s590 = smul.u32 4, %s589
      %p591 = scmp.lt.s32.totalorder %s590, 3
      %s592 = scalar_select %p591, %s590, 3
      %s593 = smul.addr %s592, 8
      %s594 = scalar_lea.vmem %s5, %s593
    $region41: #{hashed_conv2d_forward.1} parent=1 // pred_fallthru
      _
    %595 = vsyncpa [#allocation4], 1

</llo_original>
